<compile_context>
chip_gen: v7x
topology: tpu7x:2x2x1
jax: 0.10.0
libtpu: 0.0.40
codegen_flags: <defaults>
</compile_context>

<pallas_src>
import jax
import jax.numpy as jnp
from jax.experimental import pallas as pl
from jax.experimental.pallas import tpu as pltpu

COST_WEIGHTS = (1.0, 1.0)
GAMMA = 10.0
LOSS_WEIGHT = 0.05


def _make_policy_loss_kernel(K, B):
    """Kernel closure over static K (number of decision tensors) and B (batch)."""
    w0, w1 = float(COST_WEIGHTS[0]), float(COST_WEIGHTS[1])
    equal_w = (w0 == w1)

    def kernel(*refs):
        dec_refs = refs[:K]          # K refs, each (2B, N) in VMEM
        inc_ref = refs[K]            # (B, N) in VMEM
        out_ref = refs[K + 1]        # (1, 1) in SMEM

        inc = inc_ref[...].astype(jnp.float32)        # (B, N)
        corr = 1.0 - inc                              # correctness = 1 - incorrectness
        N = inc.shape[1]

        # Elementwise accumulation of all decision chunks (cheap VPU adds),
        # single multiply by `corr` and a single full reduce at the end.
        acc = jnp.zeros_like(inc)                     # (B, N) f32
        if equal_w:
            for r in dec_refs:
                d = r[...].astype(jnp.float32)        # (2B, N)
                acc = acc + d[:B, :] + d[B:, :]
            dec_sum = w0 * jnp.sum(corr * acc)
        else:
            for r in dec_refs:
                d = r[...].astype(jnp.float32)
                acc = acc + w0 * d[:B, :] + w1 * d[B:, :]
            dec_sum = jnp.sum(corr * acc)

        inv_bn = 1.0 / float(B * N)
        dec_term = dec_sum * (inv_bn / float(K))      # (1/K) * sum_k [w*mean(corr*chunk)]
        inc_term = GAMMA * jnp.sum(inc) * inv_bn      # mean(inc * gamma), constant over k

        out_ref[0, 0] = (dec_term + inc_term) * LOSS_WEIGHT

    return kernel


def policy_loss_pallas(decisions_set, incorrectness):
    """decisions_set: list of K arrays, each (2B, N); incorrectness: (B, N)."""
    K = len(decisions_set)
    B, N = incorrectness.shape
    for d in decisions_set:
        assert d.shape == (2 * B, N), (d.shape, (2 * B, N))

    kernel = _make_policy_loss_kernel(K, B)

    out = pl.pallas_call(
        kernel,
        out_shape=jax.ShapeDtypeStruct((1, 1), jnp.float32),
        # Grid-less: full-extent blocks, everything resident in VMEM at once.
        in_specs=[pl.BlockSpec(memory_space=pltpu.MemorySpace.VMEM)] * (K + 1),
        out_specs=pl.BlockSpec(memory_space=pltpu.MemorySpace.SMEM),
    )(*decisions_set, incorrectness)
    return out[0, 0]


def policy_loss_ref(decisions_set, incorrectness):
    corr = 1.0 - incorrectness
    B = incorrectness.shape[0]
    losses = []
    for d in decisions_set:
        c0, c1 = d[:B], d[B:]
        l = (COST_WEIGHTS[0] * jnp.mean(corr * c0)
             + COST_WEIGHTS[1] * jnp.mean(corr * c1)
             + jnp.mean(incorrectness * GAMMA))
        losses.append(l)
    return LOSS_WEIGHT * (sum(losses) / len(losses))


if __name__ == "__main__":
    key = jax.random.PRNGKey(0)
    K, B, N = 3, 8, 128                              # 3 decision tensors, each (16, 128)
    k_dec, k_inc = jax.random.split(key)

    decisions_set = [
        jax.random.uniform(jax.random.fold_in(k_dec, i), (2 * B, N), dtype=jnp.float32)
        for i in range(K)
    ]
    # incorrectness in [0, 1]
    incorrectness = jax.random.uniform(k_inc, (B, N), dtype=jnp.float32)

    out = policy_loss_pallas(decisions_set, incorrectness)
    out = jax.block_until_ready(out)

    ref = policy_loss_ref(decisions_set, incorrectness)
    assert jnp.allclose(out, ref, rtol=1e-5, atol=1e-6), (out, ref)

    print("KERNEL_OK")
</pallas_src>

<mosaic_0001>
module attributes {stable_mosaic.version = 11 : i64} {
  func.func @kernel(%arg0: memref<16x128xf32, #tpu.memory_space<vmem>>, %arg1: memref<16x128xf32, #tpu.memory_space<vmem>>, %arg2: memref<16x128xf32, #tpu.memory_space<vmem>>, %arg3: memref<8x128xf32, #tpu.memory_space<vmem>>, %arg4: memref<1x1xf32, #tpu.memory_space<smem>>) attributes {dimension_semantics = [], scalar_prefetch = 0 : i64, scratch_operands = 0 : i64, tpu.core_type = #tpu.core_type<tc>} {
    %c0 = arith.constant 0 : index
    %c0_0 = arith.constant 0 : index
    %0 = vector.load %arg3[%c0, %c0_0] : memref<8x128xf32, #tpu.memory_space<vmem>>, vector<8x128xf32>
    %cst = arith.constant 1.000000e+00 : f32
    %1 = vector.broadcast %cst : f32 to vector<8x128xf32>
    %2 = arith.subf %1, %0 : vector<8x128xf32>
    %cst_1 = arith.constant 0.000000e+00 : f32
    %3 = vector.broadcast %cst_1 : f32 to vector<8x128xf32>
    %c0_2 = arith.constant 0 : index
    %c0_3 = arith.constant 0 : index
    %4 = vector.load %arg0[%c0_2, %c0_3] : memref<16x128xf32, #tpu.memory_space<vmem>>, vector<16x128xf32>
    %5 = vector.extract_strided_slice %4 {offsets = [0, 0], sizes = [8, 128], strides = [1, 1]} : vector<16x128xf32> to vector<8x128xf32>
    %6 = arith.addf %3, %5 : vector<8x128xf32>
    %7 = vector.extract_strided_slice %4 {offsets = [8, 0], sizes = [8, 128], strides = [1, 1]} : vector<16x128xf32> to vector<8x128xf32>
    %8 = arith.addf %6, %7 : vector<8x128xf32>
    %c0_4 = arith.constant 0 : index
    %c0_5 = arith.constant 0 : index
    %9 = vector.load %arg1[%c0_4, %c0_5] : memref<16x128xf32, #tpu.memory_space<vmem>>, vector<16x128xf32>
    %10 = vector.extract_strided_slice %9 {offsets = [0, 0], sizes = [8, 128], strides = [1, 1]} : vector<16x128xf32> to vector<8x128xf32>
    %11 = arith.addf %8, %10 : vector<8x128xf32>
    %12 = vector.extract_strided_slice %9 {offsets = [8, 0], sizes = [8, 128], strides = [1, 1]} : vector<16x128xf32> to vector<8x128xf32>
    %13 = arith.addf %11, %12 : vector<8x128xf32>
    %c0_6 = arith.constant 0 : index
    %c0_7 = arith.constant 0 : index
    %14 = vector.load %arg2[%c0_6, %c0_7] : memref<16x128xf32, #tpu.memory_space<vmem>>, vector<16x128xf32>
    %15 = vector.extract_strided_slice %14 {offsets = [0, 0], sizes = [8, 128], strides = [1, 1]} : vector<16x128xf32> to vector<8x128xf32>
    %16 = arith.addf %13, %15 : vector<8x128xf32>
    %17 = vector.extract_strided_slice %14 {offsets = [8, 0], sizes = [8, 128], strides = [1, 1]} : vector<16x128xf32> to vector<8x128xf32>
    %18 = arith.addf %16, %17 : vector<8x128xf32>
    %19 = arith.mulf %2, %18 : vector<8x128xf32>
    %20 = vector.shape_cast %19 : vector<8x128xf32> to vector<1x8x128xf32>
    %cst_8 = arith.constant dense<0.000000e+00> : vector<1xf32>
    %21 = vector.multi_reduction <add>, %20, %cst_8 [1, 2] : vector<1x8x128xf32> to vector<1xf32>
    %22 = vector.shape_cast %21 : vector<1xf32> to vector<1x1x1xf32>
    %23 = vector.extract %22[0, 0, 0] : f32 from vector<1x1x1xf32>
    %cst_9 = arith.constant 1.000000e+00 : f32
    %24 = arith.mulf %cst_9, %23 : f32
    %cst_10 = arith.constant 3.25520843E-4 : f32
    %25 = arith.mulf %24, %cst_10 : f32
    %26 = vector.shape_cast %0 : vector<8x128xf32> to vector<1x8x128xf32>
    %cst_11 = arith.constant dense<0.000000e+00> : vector<1xf32>
    %27 = vector.multi_reduction <add>, %26, %cst_11 [1, 2] : vector<1x8x128xf32> to vector<1xf32>
    %28 = vector.shape_cast %27 : vector<1xf32> to vector<1x1x1xf32>
    %29 = vector.extract %28[0, 0, 0] : f32 from vector<1x1x1xf32>
    %cst_12 = arith.constant 1.000000e+01 : f32
    %30 = arith.mulf %cst_12, %29 : f32
    %cst_13 = arith.constant 9.765625E-4 : f32
    %31 = arith.mulf %30, %cst_13 : f32
    %32 = arith.addf %25, %31 : f32
    %cst_14 = arith.constant 5.000000e-02 : f32
    %33 = arith.mulf %32, %cst_14 : f32
    %c0_15 = arith.constant 0 : index
    %c0_16 = arith.constant 0 : index
    %34 = memref.load %arg4[%c0_15, %c0_16] : memref<1x1xf32, #tpu.memory_space<smem>>
    memref.store %33, %arg4[%c0_15, %c0_16] : memref<1x1xf32, #tpu.memory_space<smem>>
    return
  }
}

</mosaic_0001>

<llo_original>
// kernel: tpu_custom_call.1
$region0: #{tpu_custom_call.1}
  #allocation0 [shape = 'u32[]', space=smem, size = 0x4, offset = 0x4, fixed_abs, tag = 'smem constant byte address 0x4 - core index']
  #allocation1 [shape = 'u32[144,128]{1,0:T(1,128)}', space=vmem, size = 0x12000, scoped, tag = 'internal scratch']
  %s0 = inlined_call_operand.hbm [shape: f32[16,128], index: 0, kind: input, shape index: {}]
  %s1 = inlined_call_operand.hbm [shape: f32[16,128], index: 1, kind: input, shape index: {}]
  %s2 = inlined_call_operand.hbm [shape: f32[16,128], index: 2, kind: input, shape index: {}]
  %s3 = inlined_call_operand.vmem [shape: f32[8,128], index: 3, kind: input, shape index: {}]
  %s4 = inlined_call_operand.hbm [shape: f32[1,1], index: 4, kind: output, shape index: {}]
  %s5 = sld [smem:[#allocation0]]
  $region38: #{tpu_custom_call.1} parent=0
    _
  %s7 = ssub.s32 1, %s5
  %s8 = scalar_select 0, %s7, %s5
  $region1: #{tpu_custom_call.1} parent=0
    #allocation2 [shape = 'u8[8192]{0}', space=vmem, size = 0x2000, scoped, tag = 'input window, operand 0, single buffered']
    #allocation3 [shape = 's32[1]{0}', space=sflag, size = 0x4, scoped, tag = 'scoped memory for tpu_custom_call.1']
    #allocation4 [shape = 's32[1]{0}', space=sflag, size = 0x4, scoped, tag = 'scoped memory for tpu_custom_call.1']
    #allocation5 [shape = 'u8[8192]{0}', space=vmem, size = 0x2000, scoped, tag = 'input window, operand 1, single buffered']
    #allocation6 [shape = 's32[1]{0}', space=sflag, size = 0x4, scoped, tag = 'scoped memory for tpu_custom_call.1']
    #allocation7 [shape = 'u8[8192]{0}', space=vmem, size = 0x2000, scoped, tag = 'input window, operand 2, single buffered']
    #allocation8 [shape = 'u8[512]{0}', space=smem, size = 0x200, scoped, tag = 'output window, operand 0, single buffered']
    %9 = vsyncpa [#allocation3], 0
    %10 = vsyncpa [#allocation6], 0
    %11 = vsyncpa [#allocation4], 0
    // Predicated region
    $region2: #{tpu_custom_call.1} parent=1 // pred_check
      _
    $region3: #{tpu_custom_call.1} parent=1 // pred_check_branch
      %13 = sbr.rel (0) target = $region5
    $region4: #{tpu_custom_call.1} parent=1 // pred_region
      %s15 = ssub.s32 256, 256
      %16 = vsyncadd [#allocation3], %s15
      %s17 = sshll.u32 [#allocation2], 4
      %s18 = int_to_ptr.vmem [resolvable:$true] %s17
      %23 = dma.hbm_to_vmem [thread:$0]  %s0, 256, %s18, [#allocation3], 128, 128, 8
    $region5: #{tpu_custom_call.1} parent=1 // pred_fallthru
      _
    // Predicated region
    $region6: #{tpu_custom_call.1} parent=1 // pred_check
      _
    $region7: #{tpu_custom_call.1} parent=1 // pred_check_branch
      %25 = sbr.rel (0) target = $region9
    $region8: #{tpu_custom_call.1} parent=1 // pred_region
      %s27 = ssub.s32 256, 256
      %28 = vsyncadd [#allocation6], %s27
      %s29 = sshll.u32 [#allocation5], 4
      %s30 = int_to_ptr.vmem [resolvable:$true] %s29
      %35 = dma.hbm_to_vmem [thread:$0]  %s1, 256, %s30, [#allocation6], 128, 128, 8
    $region9: #{tpu_custom_call.1} parent=1 // pred_fallthru
      _
    // Predicated region
    $region10: #{tpu_custom_call.1} parent=1 // pred_check
      _
    $region11: #{tpu_custom_call.1} parent=1 // pred_check_branch
      %37 = sbr.rel (0) target = $region13
    $region12: #{tpu_custom_call.1} parent=1 // pred_region
      %s39 = ssub.s32 256, 256
      %40 = vsyncadd [#allocation6], %s39
      %s41 = sshll.u32 [#allocation7], 4
      %s42 = int_to_ptr.vmem [resolvable:$true] %s41
      %47 = dma.hbm_to_vmem [thread:$0]  %s2, 256, %s42, [#allocation6], 128, 128, 8
    $region13: #{tpu_custom_call.1} parent=1 // pred_fallthru
      _
    // Predicated region
    $region14: #{tpu_custom_call.1} parent=1 // pred_check
      _
    $region15: #{tpu_custom_call.1} parent=1 // pred_check_branch
      %49 = sbr.rel (0) target = $region17
    $region16: #{tpu_custom_call.1} parent=1 // pred_region
      _
    $region17: #{tpu_custom_call.1} parent=1 // pred_fallthru
      _
    // Predicated region
    $region18: #{tpu_custom_call.1} parent=1 // pred_check
      _
    $region19: #{tpu_custom_call.1} parent=1 // pred_check_branch
      %51 = sbr.rel (0) target = $region21
    $region20: #{tpu_custom_call.1} parent=1 // pred_region
      %52 = dma.done [#allocation3], 256
    $region21: #{tpu_custom_call.1} parent=1 // pred_fallthru
      _
    // Predicated region
    $region22: #{tpu_custom_call.1} parent=1 // pred_check
      _
    $region23: #{tpu_custom_call.1} parent=1 // pred_check_branch
      %54 = sbr.rel (0) target = $region25
    $region24: #{tpu_custom_call.1} parent=1 // pred_region
      %55 = dma.done [#allocation6], 256
    $region25: #{tpu_custom_call.1} parent=1 // pred_fallthru
      _
    // Predicated region
    $region26: #{tpu_custom_call.1} parent=1 // pred_check
      _
    $region27: #{tpu_custom_call.1} parent=1 // pred_check_branch
      %57 = sbr.rel (0) target = $region29
    $region28: #{tpu_custom_call.1} parent=1 // pred_region
      %58 = dma.done [#allocation6], 256
    $region29: #{tpu_custom_call.1} parent=1 // pred_fallthru
      _
    %v59 = vld [vmem:[%s3] sm:$0xff]
    %v60 = vsub.f32 1.0, %v59
    %v61 = vld [vmem:[#allocation2] sm:$0xff]
    %v62 = vld [vmem:[#allocation2 + $0x8] sm:$0xff]
    %v63 = vadd.f32 %v61, 0.0
    %v64 = vadd.f32 %v63, %v62
    %v65 = vld [vmem:[#allocation5] sm:$0xff]
    %v66 = vld [vmem:[#allocation5 + $0x8] sm:$0xff]
    %v67 = vadd.f32 %v64, %v65
    %v68 = vadd.f32 %v67, %v66
    %v69 = vld [vmem:[#allocation7] sm:$0xff]
    %v70 = vld [vmem:[#allocation7 + $0x8] sm:$0xff]
    %v71 = vadd.f32 %v68, %v69
    %v72 = vadd.f32 %v71, %v70
    %v73 = vmul.f32 %v60, %v72
    %74 = vadd.xlane.f32.xlu0 %v73
    %v75 = vpop.xlane.xlu0 %74
    %v76 = vrot.slane %v75, 4
    %v77 = vadd.f32 %v75, %v76
    %v78 = vrot.slane %v77, 2
    %v79 = vadd.f32 %v77, %v78
    %v80 = vrot.slane %v79, 1
    %v81 = vadd.f32 %v79, %v80
    %s82 = vtos %v81
    %s83 = smul.f32 %s82, 0.00032552084
    %84 = vadd.xlane.f32.xlu0 %v59
    %v85 = vpop.xlane.xlu0 %84
    %v86 = vrot.slane %v85, 4
    %v87 = vadd.f32 %v85, %v86
    %v88 = vrot.slane %v87, 2
    %v89 = vadd.f32 %v87, %v88
    %v90 = vrot.slane %v89, 1
    %v91 = vadd.f32 %v89, %v90
    %s92 = vtos %v91
    %s93 = smul.f32 %s92, 10.0
    %s94 = smul.f32 %s93, 0.0009765625
    %s95 = sadd.f32 %s83, %s94
    %s96 = smul.f32 %s95, 0.05
    %s97 = scalar_lea.smem [#allocation8], 0
    %98 = sst [smem:[%s97]] %s96
    // Predicated region
    $region30: #{tpu_custom_call.1} parent=1 // pred_check
      _
    $region31: #{tpu_custom_call.1} parent=1 // pred_check_branch
      %100 = sbr.rel (0) target = $region33
    $region32: #{tpu_custom_call.1} parent=1 // pred_region
      %s102 = ssub.s32 16, 16
      %103 = vsyncadd [#allocation4], %s102
      %106 = dma.smem_to_hbm [#allocation8], 16, %s4, [#allocation4]
    $region33: #{tpu_custom_call.1} parent=1 // pred_fallthru
      _
    // Predicated region
    $region34: #{tpu_custom_call.1} parent=1 // pred_check
      _
    $region35: #{tpu_custom_call.1} parent=1 // pred_check_branch
      %108 = sbr.rel (0) target = $region37
    $region36: #{tpu_custom_call.1} parent=1 // pred_region
      %109 = dma.done [#allocation4], 16
    $region37: #{tpu_custom_call.1} parent=1 // pred_fallthru
      _
    %110 = sfence
    %111 = vsyncpa [#allocation3], 1
    %112 = vsyncpa [#allocation6], 1
    %113 = vsyncpa [#allocation4], 1

</llo_original>
